<compile_context>
chip_gen: v6e
topology: v6e:2x2x1
jax: 0.10.0
libtpu: 0.0.40
codegen_flags: <defaults>
</compile_context>

<pallas_src>
import functools

import jax
import jax.numpy as jnp
from jax import lax
from jax.experimental import pallas as pl
from jax.experimental.pallas import tpu as pltpu

_LANE = 128
_ALPHA = 0.3       # fixed in the PyTorch module
_CE_RATIO = 0.5    # fixed in the PyTorch module
# 4096 rows * 128 lanes * 4 B = 2 MiB per f32 input block; 2 inputs x 2 pipeline
# buffers = 8 MiB -> fits v5e's 16 MiB default scoped VMEM as well as v6e/v7x.
# (v6e/v7x could take 8192 rows with vmem_limit_bytes; 4096 keeps one safe path.)
_MAX_TILE_ROWS = 4096


def _sublane_multiple(dtype):
    # f32 -> 8, bf16/f16 -> 16, int8/fp8/bool -> 32 (packed sublane layouts).
    itemsize = jnp.dtype(dtype).itemsize
    return max(8, 32 // max(1, min(4, itemsize)))


def _combo_partials_kernel(x_ref, t_ref, oxt_ref, osum_ref, oce_ref, *,
                           rows, tile_r, acc_rows, tiles_per_chunk,
                           alpha, eps, any_partial):
    c = pl.program_id(0)   # chunk ("parallel" axis -> one per TensorCore on v7x)
    k = pl.program_id(1)   # tile within chunk ("arbitrary" reduction axis)

    @pl.when(k == 0)
    def _():
        oxt_ref[...] = jnp.zeros_like(oxt_ref)
        osum_ref[...] = jnp.zeros_like(osum_ref)
        oce_ref[...] = jnp.zeros_like(oce_ref)

    x = x_ref[...].astype(jnp.float32)
    t = t_ref[...].astype(jnp.float32)

    def fold(a):
        # (tile_r, 128) -> (acc_rows, 128): split of the sublane-major dim is
        # layout-preserving (acc_rows % 8 == 0), so this is cross-vreg VPU adds
        # only — no XLU until the wrapper's final jnp.sum.
        return jnp.sum(a.reshape(tile_r // acc_rows, acc_rows, _LANE), axis=0)

    def accumulate(xv, tv, valid_rows):
        if valid_rows is not None:
            rid = lax.broadcasted_iota(jnp.int32, (tile_r, _LANE), 0)
            valid = rid < valid_rows
            xv = jnp.where(valid, xv, 0.0)   # zero BEFORE clip/log: no NaN/Inf leak
            tv = jnp.where(valid, tv, 0.0)
        xt = xv * tv
        s = xv + tv
        xc = jnp.clip(xv, eps, 1.0 - eps)    # matches PyTorch f32 (1-1e-9 -> 1.0)
        # Unscaled BCE stream: t*log(x) + (1-alpha)*(1-t)*log(1-x).
        # The -alpha factor is applied once to the reduced scalar in the wrapper.
        ce = tv * jnp.log(xc) + (1.0 - alpha) * ((1.0 - tv) * jnp.log(1.0 - xc))
        if valid_rows is not None:
            ce = jnp.where(valid, ce, 0.0)
        oxt_ref[...] += fold(xt)
        osum_ref[...] += fold(s)
        oce_ref[...] += fold(ce)

    if any_partial:
        start_row = (c * tiles_per_chunk + k) * tile_r
        is_full = start_row + tile_r <= rows

        @pl.when(is_full)
        def _():
            accumulate(x, t, None)            # hot path: no masking work at all

        @pl.when(jnp.logical_not(is_full))
        def _():
            accumulate(x, t, rows - start_row)
    else:
        accumulate(x, t, None)


def combo_loss(inputs, targets, smooth=1.0, eps=1e-9):
    """ComboLoss forward. `inputs` are probabilities, `targets` labels. Any shape."""
    n = int(inputs.size)
    x_flat = inputs.reshape(-1)
    t_flat = targets.reshape(-1)

    sub = max(_sublane_multiple(x_flat.dtype), _sublane_multiple(t_flat.dtype))
    rows = n // _LANE            # number of full 128-lane rows
    n_main = rows * _LANE

    part_xt = jnp.float32(0.0)
    part_sum = jnp.float32(0.0)
    part_ce = jnp.float32(0.0)
    n_kernel = 0

    if rows >= sub:
        n_kernel = n_main
        if n_main != n:
            # TODO(synk): the ragged (<128-elem) tail forces a prefix-slice copy
            # here; a manual-DMA (memory_space=pl.ANY) variant could stream the
            # unpadded flat array instead.
            x_main = x_flat[:n_main]
            t_main = t_flat[:n_main]
        else:
            x_main, t_main = x_flat, t_flat          # zero-copy reshape below
        x2 = x_main.reshape(rows, _LANE)
        t2 = t_main.reshape(rows, _LANE)

        # Largest sublane-aligned tile that fits VMEM and never exceeds the
        # array (blocks are at most row-partial; handled in-kernel).
        tile_r = min(_MAX_TILE_ROWS, (rows // sub) * sub)
        n_tiles = -(-rows // tile_r)
        # Two chunks -> "parallel" leading axis so v7x's two TCs each reduce
        # half the tiles; on v5e/v6e (1 TC) it is simply a (2, k) loop.
        n_chunks = 2 if n_tiles >= 2 else 1
        tiles_per_chunk = -(-n_tiles // n_chunks)
        acc_rows = 32 if tile_r % 32 == 0 else (16 if tile_r % 16 == 0 else 8)
        any_partial = (n_chunks * tiles_per_chunk * tile_r) != rows

        kernel = functools.partial(
            _combo_partials_kernel, rows=rows, tile_r=tile_r, acc_rows=acc_rows,
            tiles_per_chunk=tiles_per_chunk, alpha=_ALPHA, eps=float(eps),
            any_partial=any_partial)

        oob_possible = n_chunks * tiles_per_chunk > n_tiles
        if oob_possible:
            # Clamp so the unused trailing block (odd tile count split over two
            # chunks) never DMAs out of bounds; its contribution is masked to 0.
            def in_map(c, k):
                return (jnp.minimum(c * tiles_per_chunk + k, n_tiles - 1), 0)
        else:
            def in_map(c, k):
                return (c * tiles_per_chunk + k, 0)

        out_map = lambda c, k: (c, 0)
        part_shape = jax.ShapeDtypeStruct((n_chunks * acc_rows, _LANE), jnp.float32)

        oxt, osum, oce = pl.pallas_call(
            kernel,
            out_shape=(part_shape, part_shape, part_shape),
            grid_spec=pltpu.PrefetchScalarGridSpec(
                num_scalar_prefetch=0,
                grid=(n_chunks, tiles_per_chunk),
                in_specs=[
                    pl.BlockSpec((tile_r, _LANE), in_map),
                    pl.BlockSpec((tile_r, _LANE), in_map),
                ],
                out_specs=(
                    pl.BlockSpec((acc_rows, _LANE), out_map),
                    pl.BlockSpec((acc_rows, _LANE), out_map),
                    pl.BlockSpec((acc_rows, _LANE), out_map),
                ),
            ),
            compiler_params=pltpu.CompilerParams(
                dimension_semantics=("parallel", "arbitrary")),
        )(x2, t2)

        part_xt = jnp.sum(oxt)
        part_sum = jnp.sum(osum)
        part_ce = jnp.sum(oce)

    if n_kernel != n:
        # Sub-128 ragged tail (or a tiny input): plain jnp, negligible work.
        x_tail = x_flat[n_kernel:].astype(jnp.float32)
        t_tail = t_flat[n_kernel:].astype(jnp.float32)
        part_xt = part_xt + jnp.sum(x_tail * t_tail)
        part_sum = part_sum + jnp.sum(x_tail) + jnp.sum(t_tail)
        xc = jnp.clip(x_tail, eps, 1.0 - eps)
        part_ce = part_ce + jnp.sum(
            t_tail * jnp.log(xc) + (1.0 - _ALPHA) * (1.0 - t_tail) * jnp.log(1.0 - xc))

    dice = (2.0 * part_xt + smooth) / (part_sum + smooth)
    weighted_ce = (-_ALPHA) * part_ce / jnp.float32(n)
    return _CE_RATIO * weighted_ce - (1.0 - _CE_RATIO) * dice


def _reference_combo_loss(inputs, targets, smooth=1.0, eps=1e-9):
    alpha = 0.3
    ce_ratio = 0.5
    x = inputs.reshape(-1).astype(jnp.float32)
    t = targets.reshape(-1).astype(jnp.float32)
    intersection = jnp.sum(x * t)
    dice = (2.0 * intersection + smooth) / (jnp.sum(x) + jnp.sum(t) + smooth)
    xc = jnp.clip(x, eps, 1.0 - eps)
    out = -(alpha * (t * jnp.log(xc) + (1 - alpha) * (1.0 - t) * jnp.log(1.0 - xc)))
    weighted_ce = jnp.mean(out)
    return ce_ratio * weighted_ce - (1 - ce_ratio) * dice


if __name__ == "__main__":
    key = jax.random.PRNGKey(0)
    k1, k2 = jax.random.split(key)

    # NCHW-shaped example (batch=2, channels=4, spatial=16x16).
    logits = jax.random.normal(k1, (2, 4, 16, 16), dtype=jnp.float32)
    inputs = jax.nn.sigmoid(logits)                       # probabilities
    targets = jax.random.bernoulli(k2, 0.5, (2, 4, 16, 16)).astype(jnp.float32)

    loss = jax.block_until_ready(combo_loss(inputs, targets))

    ref = _reference_combo_loss(inputs, targets)
    assert jnp.allclose(loss, ref, atol=1e-5, rtol=1e-5), (loss, ref)

    print("KERNEL_OK")
</pallas_src>

<mosaic_0001>
module attributes {stable_mosaic.version = 11 : i64} {
  func.func @_combo_partials_kernel(%arg0: i32, %arg1: i32, %arg2: memref<16x128xf32, #tpu.memory_space<vmem>>, %arg3: memref<16x128xf32, #tpu.memory_space<vmem>>, %arg4: memref<16x128xf32, #tpu.memory_space<vmem>>, %arg5: memref<16x128xf32, #tpu.memory_space<vmem>>, %arg6: memref<16x128xf32, #tpu.memory_space<vmem>>) attributes {dimension_semantics = [#tpu.dimension_semantics<parallel>, #tpu.dimension_semantics<arbitrary>], iteration_bounds = array<i64: 1, 1>, scalar_prefetch = 0 : i64, scratch_operands = 0 : i64, tpu.core_type = #tpu.core_type<tc>, window_params = [{transform_indices = @transform_0, window_bounds = array<i64: 16, 128>}, {transform_indices = @transform_1, window_bounds = array<i64: 16, 128>}, {transform_indices = @transform_2, window_bounds = array<i64: 16, 128>}, {transform_indices = @transform_3, window_bounds = array<i64: 16, 128>}, {transform_indices = @transform_4, window_bounds = array<i64: 16, 128>}]} {
    %c0_i32 = arith.constant 0 : i32
    %0 = arith.cmpi eq, %arg1, %c0_i32 : i32
    %1 = arith.extui %0 : i1 to i32
    %c0_i32_0 = arith.constant 0 : i32
    %2 = arith.cmpi ne, %1, %c0_i32_0 : i32
    scf.if %2 {
      %cst_23 = arith.constant 0.000000e+00 : f32
      %37 = vector.broadcast %cst_23 : f32 to vector<16x128xf32>
      %c0_24 = arith.constant 0 : index
      %c0_25 = arith.constant 0 : index
      %38 = vector.load %arg4[%c0_24, %c0_25] : memref<16x128xf32, #tpu.memory_space<vmem>>, vector<16x128xf32>
      tpu.vector_store %arg4[%c0_24, %c0_25], %37 {strides = array<i32>} : memref<16x128xf32, #tpu.memory_space<vmem>>, vector<16x128xf32>,
      %cst_26 = arith.constant 0.000000e+00 : f32
      %39 = vector.broadcast %cst_26 : f32 to vector<16x128xf32>
      %c0_27 = arith.constant 0 : index
      %c0_28 = arith.constant 0 : index
      %40 = vector.load %arg5[%c0_27, %c0_28] : memref<16x128xf32, #tpu.memory_space<vmem>>, vector<16x128xf32>
      tpu.vector_store %arg5[%c0_27, %c0_28], %39 {strides = array<i32>} : memref<16x128xf32, #tpu.memory_space<vmem>>, vector<16x128xf32>,
      %cst_29 = arith.constant 0.000000e+00 : f32
      %41 = vector.broadcast %cst_29 : f32 to vector<16x128xf32>
      %c0_30 = arith.constant 0 : index
      %c0_31 = arith.constant 0 : index
      %42 = vector.load %arg6[%c0_30, %c0_31] : memref<16x128xf32, #tpu.memory_space<vmem>>, vector<16x128xf32>
      tpu.vector_store %arg6[%c0_30, %c0_31], %41 {strides = array<i32>} : memref<16x128xf32, #tpu.memory_space<vmem>>, vector<16x128xf32>,
    } else {
    }
    %c0 = arith.constant 0 : index
    %c0_1 = arith.constant 0 : index
    %3 = vector.load %arg2[%c0, %c0_1] : memref<16x128xf32, #tpu.memory_space<vmem>>, vector<16x128xf32>
    %c0_2 = arith.constant 0 : index
    %c0_3 = arith.constant 0 : index
    %4 = vector.load %arg3[%c0_2, %c0_3] : memref<16x128xf32, #tpu.memory_space<vmem>>, vector<16x128xf32>
    %5 = arith.mulf %3, %4 : vector<16x128xf32>
    %6 = arith.addf %3, %4 : vector<16x128xf32>
    %cst = arith.constant 9.99999971E-10 : f32
    %cst_4 = arith.constant 1.000000e+00 : f32
    %7 = vector.broadcast %cst : f32 to vector<16x128xf32>
    %8 = arith.maximumf %7, %3 : vector<16x128xf32>
    %9 = vector.broadcast %cst_4 : f32 to vector<16x128xf32>
    %10 = arith.minimumf %9, %8 : vector<16x128xf32>
    %11 = math.log %10 : vector<16x128xf32>
    %12 = arith.mulf %4, %11 : vector<16x128xf32>
    %cst_5 = arith.constant 1.000000e+00 : f32
    %13 = vector.broadcast %cst_5 : f32 to vector<16x128xf32>
    %14 = arith.subf %13, %4 : vector<16x128xf32>
    %cst_6 = arith.constant 1.000000e+00 : f32
    %15 = vector.broadcast %cst_6 : f32 to vector<16x128xf32>
    %16 = arith.subf %15, %10 : vector<16x128xf32>
    %17 = math.log %16 : vector<16x128xf32>
    %18 = arith.mulf %14, %17 : vector<16x128xf32>
    %cst_7 = arith.constant 0.699999988 : f32
    %19 = vector.broadcast %cst_7 : f32 to vector<16x128xf32>
    %20 = arith.mulf %19, %18 : vector<16x128xf32>
    %21 = arith.addf %12, %20 : vector<16x128xf32>
    %c0_8 = arith.constant 0 : index
    %c0_9 = arith.constant 0 : index
    %22 = vector.load %arg4[%c0_8, %c0_9] : memref<16x128xf32, #tpu.memory_space<vmem>>, vector<16x128xf32>
    %23 = vector.shape_cast %5 : vector<16x128xf32> to vector<1x16x128xf32>
    %cst_10 = arith.constant dense<0.000000e+00> : vector<16x128xf32>
    %24 = vector.multi_reduction <add>, %23, %cst_10 [0] : vector<1x16x128xf32> to vector<16x128xf32>
    %25 = arith.addf %22, %24 : vector<16x128xf32>
    %c0_11 = arith.constant 0 : index
    %c0_12 = arith.constant 0 : index
    %26 = vector.load %arg4[%c0_11, %c0_12] : memref<16x128xf32, #tpu.memory_space<vmem>>, vector<16x128xf32>
    tpu.vector_store %arg4[%c0_11, %c0_12], %25 {strides = array<i32>} : memref<16x128xf32, #tpu.memory_space<vmem>>, vector<16x128xf32>,
    %c0_13 = arith.constant 0 : index
    %c0_14 = arith.constant 0 : index
    %27 = vector.load %arg5[%c0_13, %c0_14] : memref<16x128xf32, #tpu.memory_space<vmem>>, vector<16x128xf32>
    %28 = vector.shape_cast %6 : vector<16x128xf32> to vector<1x16x128xf32>
    %cst_15 = arith.constant dense<0.000000e+00> : vector<16x128xf32>
    %29 = vector.multi_reduction <add>, %28, %cst_15 [0] : vector<1x16x128xf32> to vector<16x128xf32>
    %30 = arith.addf %27, %29 : vector<16x128xf32>
    %c0_16 = arith.constant 0 : index
    %c0_17 = arith.constant 0 : index
    %31 = vector.load %arg5[%c0_16, %c0_17] : memref<16x128xf32, #tpu.memory_space<vmem>>, vector<16x128xf32>
    tpu.vector_store %arg5[%c0_16, %c0_17], %30 {strides = array<i32>} : memref<16x128xf32, #tpu.memory_space<vmem>>, vector<16x128xf32>,
    %c0_18 = arith.constant 0 : index
    %c0_19 = arith.constant 0 : index
    %32 = vector.load %arg6[%c0_18, %c0_19] : memref<16x128xf32, #tpu.memory_space<vmem>>, vector<16x128xf32>
    %33 = vector.shape_cast %21 : vector<16x128xf32> to vector<1x16x128xf32>
    %cst_20 = arith.constant dense<0.000000e+00> : vector<16x128xf32>
    %34 = vector.multi_reduction <add>, %33, %cst_20 [0] : vector<1x16x128xf32> to vector<16x128xf32>
    %35 = arith.addf %32, %34 : vector<16x128xf32>
    %c0_21 = arith.constant 0 : index
    %c0_22 = arith.constant 0 : index
    %36 = vector.load %arg6[%c0_21, %c0_22] : memref<16x128xf32, #tpu.memory_space<vmem>>, vector<16x128xf32>
    tpu.vector_store %arg6[%c0_21, %c0_22], %35 {strides = array<i32>} : memref<16x128xf32, #tpu.memory_space<vmem>>, vector<16x128xf32>,
    return
  }
  func.func @transform_0(%arg0: i32, %arg1: i32) -> (i32, i32) {
    %c1_i32 = arith.constant 1 : i32
    %0 = arith.muli %arg0, %c1_i32 : i32
    %1 = arith.addi %0, %arg1 : i32
    %c0_i32 = arith.constant 0 : i32
    %c0_i32_0 = arith.constant 0 : i32
    return %1, %c0_i32 : i32, i32
  }
  func.func @transform_1(%arg0: i32, %arg1: i32) -> (i32, i32) {
    %c1_i32 = arith.constant 1 : i32
    %0 = arith.muli %arg0, %c1_i32 : i32
    %1 = arith.addi %0, %arg1 : i32
    %c0_i32 = arith.constant 0 : i32
    %c0_i32_0 = arith.constant 0 : i32
    return %1, %c0_i32 : i32, i32
  }
  func.func @transform_2(%arg0: i32, %arg1: i32) -> (i32, i32) {
    %c0_i32 = arith.constant 0 : i32
    %c0_i32_0 = arith.constant 0 : i32
    return %arg0, %c0_i32 : i32, i32
  }
  func.func @transform_3(%arg0: i32, %arg1: i32) -> (i32, i32) {
    %c0_i32 = arith.constant 0 : i32
    %c0_i32_0 = arith.constant 0 : i32
    return %arg0, %c0_i32 : i32, i32
  }
  func.func @transform_4(%arg0: i32, %arg1: i32) -> (i32, i32) {
    %c0_i32 = arith.constant 0 : i32
    %c0_i32_0 = arith.constant 0 : i32
    return %arg0, %c0_i32 : i32, i32
  }
}

</mosaic_0001>

<llo_original>
// kernel: tpu_custom_call.1
$region0: #{tpu_custom_call.1}
  #allocation0 [shape = 'u32[]', space=smem, size = 0x4, offset = 0x4, fixed_abs, tag = 'smem constant byte address 0x4 - core index']
  #allocation1 [shape = 'u32[144,128]{1,0:T(1,128)}', space=vmem, size = 0x12000, scoped, tag = 'internal scratch']
  %s0 = inlined_call_operand.hbm [shape: f32[16,128], index: 0, kind: input, shape index: {}]
  %s1 = inlined_call_operand.hbm [shape: f32[16,128], index: 1, kind: input, shape index: {}]
  %s2 = inlined_call_operand.hbm [shape: f32[16,128], index: 2, kind: output, shape index: {0}]
  %s3 = inlined_call_operand.hbm [shape: f32[16,128], index: 3, kind: output, shape index: {1}]
  %s4 = inlined_call_operand.hbm [shape: f32[16,128], index: 4, kind: output, shape index: {2}]
  %5 = xla_tuple %s2, %s3, %s4
  %s6 = sld [smem:[#allocation0]]
  $region46: #{tpu_custom_call.1} parent=0
    _
  %s8 = ssub.s32 1, %s6
  %s9 = scalar_select 0, %s8, %s6
  $region1: #{tpu_custom_call.1} parent=0
    #allocation2 [shape = 'u8[8192]{0}', space=vmem, size = 0x2000, scoped, tag = 'input window, operand 0, single buffered']
    #allocation3 [shape = 's32[1]{0}', space=sflag, size = 0x4, scoped, tag = 'scoped memory for tpu_custom_call.1']
    #allocation4 [shape = 's32[1]{0}', space=sflag, size = 0x4, scoped, tag = 'scoped memory for tpu_custom_call.1']
    #allocation5 [shape = 'u8[8192]{0}', space=vmem, size = 0x2000, scoped, tag = 'input window, operand 1, single buffered']
    #allocation6 [shape = 's32[1]{0}', space=sflag, size = 0x4, scoped, tag = 'scoped memory for tpu_custom_call.1']
    #allocation7 [shape = 'u8[8192]{0}', space=vmem, size = 0x2000, scoped, tag = 'output window, operand 0, single buffered']
    #allocation8 [shape = 'u8[8192]{0}', space=vmem, size = 0x2000, scoped, tag = 'output window, operand 1, single buffered']
    #allocation9 [shape = 's32[1]{0}', space=sflag, size = 0x4, scoped, tag = 'scoped memory for tpu_custom_call.1']
    #allocation10 [shape = 'u8[8192]{0}', space=vmem, size = 0x2000, scoped, tag = 'output window, operand 2, single buffered']
    %10 = vsyncpa [#allocation3], 0
    %11 = vsyncpa [#allocation6], 0
    %12 = vsyncpa [#allocation4], 0
    %13 = vsyncpa [#allocation9], 0
    // Predicated region
    $region2: #{tpu_custom_call.1} parent=1 // pred_check
      _
    $region3: #{tpu_custom_call.1} parent=1 // pred_check_branch
      %15 = sbr.rel (0) target = $region5
    $region4: #{tpu_custom_call.1} parent=1 // pred_region
      %s16 = sadd.s32 0, 0
      %s17 = smul.u32 2, %s16
      %s19 = ssub.s32 256, 256
      %20 = vsyncadd [#allocation3], %s19
      %s21 = smul.addr %s17, 128
      %s22 = scalar_lea.hbm %s0, %s21
      %s23 = sshll.u32 [#allocation2], 4
      %s24 = int_to_ptr.vmem [resolvable:$true] %s23
      %29 = dma.hbm_to_vmem [thread:$0]  %s22, 256, %s24, [#allocation3], 128, 128, 8
    $region5: #{tpu_custom_call.1} parent=1 // pred_fallthru
      _
    // Predicated region
    $region6: #{tpu_custom_call.1} parent=1 // pred_check
      _
    $region7: #{tpu_custom_call.1} parent=1 // pred_check_branch
      %31 = sbr.rel (0) target = $region9
    $region8: #{tpu_custom_call.1} parent=1 // pred_region
      %s32 = sadd.s32 0, 0
      %s33 = smul.u32 2, %s32
      %s35 = ssub.s32 256, 256
      %36 = vsyncadd [#allocation6], %s35
      %s37 = smul.addr %s33, 128
      %s38 = scalar_lea.hbm %s1, %s37
      %s39 = sshll.u32 [#allocation5], 4
      %s40 = int_to_ptr.vmem [resolvable:$true] %s39
      %45 = dma.hbm_to_vmem [thread:$0]  %s38, 256, %s40, [#allocation6], 128, 128, 8
    $region9: #{tpu_custom_call.1} parent=1 // pred_fallthru
      _
    // Predicated region
    $region10: #{tpu_custom_call.1} parent=1 // pred_check
      _
    $region11: #{tpu_custom_call.1} parent=1 // pred_check_branch
      %47 = sbr.rel (0) target = $region13
    $region12: #{tpu_custom_call.1} parent=1 // pred_region
      %48 = dma.done [#allocation3], 256
    $region13: #{tpu_custom_call.1} parent=1 // pred_fallthru
      _
    // Predicated region
    $region14: #{tpu_custom_call.1} parent=1 // pred_check
      _
    $region15: #{tpu_custom_call.1} parent=1 // pred_check_branch
      %50 = sbr.rel (0) target = $region17
    $region16: #{tpu_custom_call.1} parent=1 // pred_region
      %51 = dma.done [#allocation6], 256
    $region17: #{tpu_custom_call.1} parent=1 // pred_fallthru
      _
    %s52 = sadd.s32 0, 0
    %s53 = smul.u32 2, %s52
    %s54 = sadd.s32 0, 0
    %s55 = smul.u32 2, %s54
    %p56 = scmp.eq.s32.totalorder 0, 0
    // Predicated region
    $region18: #{tpu_custom_call.1} parent=1 // pred_check
      %p57 = pneg %p56
    $region19: #{tpu_custom_call.1} parent=1 // pred_check_branch
      %59 = sbr.rel (%p57) target = $region21
    $region20: #{tpu_custom_call.1} parent=1 // pred_region
      %60 = vst [vmem:[#allocation7] sm:$0xff] 0.0
      %61 = vst [vmem:[#allocation7 + $0x8] sm:$0xff] 0.0
      %62 = vst [vmem:[#allocation8] sm:$0xff] 0.0
      %63 = vst [vmem:[#allocation8 + $0x8] sm:$0xff] 0.0
      %64 = vst [vmem:[#allocation10] sm:$0xff] 0.0
      %65 = vst [vmem:[#allocation10 + $0x8] sm:$0xff] 0.0
    $region21: #{tpu_custom_call.1} parent=1 // pred_fallthru
      _
    %v66 = vld [vmem:[#allocation2] sm:$0xff]
    %v67 = vld [vmem:[#allocation2 + $0x8] sm:$0xff]
    %v68 = vld [vmem:[#allocation5] sm:$0xff]
    %v69 = vld [vmem:[#allocation5 + $0x8] sm:$0xff]
    %v70 = vmul.f32 %v66, %v68
    %v71 = vmul.f32 %v67, %v69
    %v72 = vadd.f32 %v66, %v68
    %v73 = vadd.f32 %v67, %v69
    %v74 = vmax.f32 %v66, 1e-09
    %v75 = vmax.f32 %v67, 1e-09
    %v76 = vmin.f32 %v74, 1.0
    %v77 = vmin.f32 %v75, 1.0
    %v78 = vlog2.pop %v76
    %v79 = vmul.f32 %v78, 0.6931472
    %v80 = vlog2.pop %v77
    %v81 = vmul.f32 %v80, 0.6931472
    %v82 = vmul.f32 %v68, %v79
    %v83 = vmul.f32 %v69, %v81
    %v84 = vsub.f32 1.0, %v68
    %v85 = vsub.f32 1.0, %v69
    %v86 = vsub.f32 1.0, %v76
    %v87 = vsub.f32 1.0, %v77
    %v88 = vlog2.pop %v86
    %v89 = vmul.f32 %v88, 0.6931472
    %v90 = vlog2.pop %v87
    %v91 = vmul.f32 %v90, 0.6931472
    %v92 = vmul.f32 %v84, %v89
    %v93 = vmul.f32 %v85, %v91
    %v94 = vmul.f32 %v92, 0.7
    %v95 = vmul.f32 %v93, 0.7
    %v96 = vadd.f32 %v82, %v94
    %v97 = vadd.f32 %v83, %v95
    %v98 = vld [vmem:[#allocation7] sm:$0xff]
    %v99 = vld [vmem:[#allocation7 + $0x8] sm:$0xff]
    %v100 = vadd.f32 %v70, 0.0
    %v101 = vadd.f32 %v71, 0.0
    %v102 = vadd.f32 %v98, %v100
    %v103 = vadd.f32 %v99, %v101
    %104 = vst [vmem:[#allocation7] sm:$0xff] %v102
    %105 = vst [vmem:[#allocation7 + $0x8] sm:$0xff] %v103
    %v106 = vld [vmem:[#allocation8] sm:$0xff]
    %v107 = vld [vmem:[#allocation8 + $0x8] sm:$0xff]
    %v108 = vadd.f32 %v72, 0.0
    %v109 = vadd.f32 %v73, 0.0
    %v110 = vadd.f32 %v106, %v108
    %v111 = vadd.f32 %v107, %v109
    %112 = vst [vmem:[#allocation8] sm:$0xff] %v110
    %113 = vst [vmem:[#allocation8 + $0x8] sm:$0xff] %v111
    %v114 = vld [vmem:[#allocation10] sm:$0xff]
    %v115 = vld [vmem:[#allocation10 + $0x8] sm:$0xff]
    %v116 = vadd.f32 %v96, 0.0
    %v117 = vadd.f32 %v97, 0.0
    %v118 = vadd.f32 %v114, %v116
    %v119 = vadd.f32 %v115, %v117
    %120 = vst [vmem:[#allocation10] sm:$0xff] %v118
    %121 = vst [vmem:[#allocation10 + $0x8] sm:$0xff] %v119
    // Predicated region
    $region22: #{tpu_custom_call.1} parent=1 // pred_check
      _
    $region23: #{tpu_custom_call.1} parent=1 // pred_check_branch
      %123 = sbr.rel (0) target = $region25
    $region24: #{tpu_custom_call.1} parent=1 // pred_region
      %s125 = ssub.s32 256, 256
      %126 = vsyncadd [#allocation4], %s125
      %s127 = sshll.u32 [#allocation7], 4
      %s128 = int_to_ptr.vmem [resolvable:$true] %s127
      %133 = dma.vmem_to_hbm [thread:$0]  %s128, 256, %s2, [#allocation4], 128, 128, 8
    $region25: #{tpu_custom_call.1} parent=1 // pred_fallthru
      _
    // Predicated region
    $region26: #{tpu_custom_call.1} parent=1 // pred_check
      _
    $region27: #{tpu_custom_call.1} parent=1 // pred_check_branch
      %135 = sbr.rel (0) target = $region29
    $region28: #{tpu_custom_call.1} parent=1 // pred_region
      %s137 = ssub.s32 256, 256
      %138 = vsyncadd [#allocation9], %s137
      %s139 = sshll.u32 [#allocation8], 4
      %s140 = int_to_ptr.vmem [resolvable:$true] %s139
      %145 = dma.vmem_to_hbm [thread:$0]  %s140, 256, %s3, [#allocation9], 128, 128, 8
    $region29: #{tpu_custom_call.1} parent=1 // pred_fallthru
      _
    // Predicated region
    $region30: #{tpu_custom_call.1} parent=1 // pred_check
      _
    $region31: #{tpu_custom_call.1} parent=1 // pred_check_branch
      %147 = sbr.rel (0) target = $region33
    $region32: #{tpu_custom_call.1} parent=1 // pred_region
      %s149 = ssub.s32 256, 256
      %150 = vsyncadd [#allocation9], %s149
      %s151 = sshll.u32 [#allocation10], 4
      %s152 = int_to_ptr.vmem [resolvable:$true] %s151
      %157 = dma.vmem_to_hbm [thread:$0]  %s152, 256, %s4, [#allocation9], 128, 128, 8
    $region33: #{tpu_custom_call.1} parent=1 // pred_fallthru
      _
    // Predicated region
    $region34: #{tpu_custom_call.1} parent=1 // pred_check
      _
    $region35: #{tpu_custom_call.1} parent=1 // pred_check_branch
      %159 = sbr.rel (0) target = $region37
    $region36: #{tpu_custom_call.1} parent=1 // pred_region
      %160 = dma.done [#allocation4], 256
    $region37: #{tpu_custom_call.1} parent=1 // pred_fallthru
      _
    // Predicated region
    $region38: #{tpu_custom_call.1} parent=1 // pred_check
      _
    $region39: #{tpu_custom_call.1} parent=1 // pred_check_branch
      %162 = sbr.rel (0) target = $region41
    $region40: #{tpu_custom_call.1} parent=1 // pred_region
      %163 = dma.done [#allocation9], 256
    $region41: #{tpu_custom_call.1} parent=1 // pred_fallthru
      _
    // Predicated region
    $region42: #{tpu_custom_call.1} parent=1 // pred_check
      _
    $region43: #{tpu_custom_call.1} parent=1 // pred_check_branch
      %165 = sbr.rel (0) target = $region45
    $region44: #{tpu_custom_call.1} parent=1 // pred_region
      %166 = dma.done [#allocation9], 256
    $region45: #{tpu_custom_call.1} parent=1 // pred_fallthru
      _
    %167 = vsyncpa [#allocation3], 1
    %168 = vsyncpa [#allocation6], 1
    %169 = vsyncpa [#allocation4], 1
    %170 = vsyncpa [#allocation9], 1

</llo_original>
